<compile_context>
chip_gen: v6e
topology: v6e:2x2x1
jax: 0.10.0
libtpu: 0.0.40
codegen_flags: <defaults>
</compile_context>

<pallas_src>
import functools
import math

import jax
import jax.numpy as jnp
from jax.experimental import pallas as pl
from jax.experimental.pallas import tpu as pltpu


def _shared_atrous_kernel(x_ref, w_ref, o_ref, xflat_ref, patch_ref, *, H, W):
    """One batch element; both dilation branches in a single MXU matmul.

    x_ref     : (1, Cin, H*W)         flattened NCHW image (lane axis = H*W)
    w_ref     : (Cout, 18*Cin + 1)    block-diag shared 3x3 weights + bias column
    o_ref     : (1, Cout, H*W)        output, channels = [dil1 | dil2]
    xflat_ref : (Cin, lpad+H*W+rpad)  VMEM scratch: row-padded flattened image
    patch_ref : (18*Cin + 1, H*W)     VMEM scratch: im2col patches (+ ones row)
    """
    Cin = x_ref.shape[1]
    HW = H * W
    # Left pad rounded up to a lane multiple so the image copy below is an aligned
    # full-vreg store; only 2*W+2 of it is ever read (row offsets +-2, col offsets +-2).
    lpad = ((2 * W + 2 + 127) // 128) * 128

    # ---- in-kernel halo: zero the pads once, drop the image in the middle ---------
    xflat_ref[...] = jnp.zeros_like(xflat_ref)
    xflat_ref[:, lpad:lpad + HW] = x_ref[0]

    # ---- column-validity masks: (w + dw) must stay inside [0, W) ------------------
    lane = jax.lax.broadcasted_iota(jnp.int32, (1, HW), 1)
    if W & (W - 1) == 0:
        wcoord = jnp.bitwise_and(lane, W - 1)          # cheap for power-of-two W
    else:
        wcoord = lane % W

    # ---- 18 shifted windows = static lane slices + one masked select each ---------
    # Row validity (h + dh in [0, H)) is handled for free by the zero pad rows; only
    # column wrap between adjacent rows of the flat layout needs masking.
    row = 0
    for dil in (1, 2):
        for kh in range(3):
            for kw in range(3):
                dh = dil * (kh - 1)
                dw = dil * (kw - 1)
                start = lpad + dh * W + dw
                piece = xflat_ref[:, start:start + HW]          # (Cin, H*W)
                if dw > 0:
                    piece = jnp.where(wcoord < (W - dw), piece, 0.0)
                elif dw < 0:
                    piece = jnp.where(wcoord >= (-dw), piece, 0.0)
                patch_ref[row:row + Cin, :] = piece
                row += Cin
    patch_ref[row:row + 1, :] = jnp.ones((1, HW), jnp.float32)  # bias row

    # ---- one MXU matmul for both branches + bias, f32 accumulation ----------------
    out = jnp.dot(w_ref[...], patch_ref[...], preferred_element_type=jnp.float32)
    o_ref[0, :, :] = out.astype(o_ref.dtype)          # lane-dense (H*W) store


def shared_atrous_conv2d(x_nchw, weights_oihw, bias1, bias2):
    """x: (N, Cin, H, W) f32; weights: (Cout/2, Cin, 3, 3). Returns (N, Cout, H, W)."""
    N, Cin, H, W = x_nchw.shape
    Co2 = weights_oihw.shape[0]
    Cout = 2 * Co2
    HW = H * W
    K = 18 * Cin + 1                  # 9 taps x 2 dilations x Cin + fused-bias row
    assert K <= 128, "Cin >= 8: split block-diag matmul into two K<=128 matmuls"

    # Free reshape (NCHW is contiguous): no transpose, no pad materialized in HBM.
    x_flat = x_nchw.reshape(N, Cin, HW)

    # Shared 3x3 weights -> (Co2, 9*Cin), (kh,kw)-major / cin-minor to match the patch
    # row order; then block-diagonal with the biases fused as the last column:
    #   [[w9, 0 , bias1],
    #    [0 , w9, bias2]]   -> (Cout, K);  output rows [0,Co2)=dil1, [Co2,Cout)=dil2.
    w9 = jnp.transpose(weights_oihw, (0, 2, 3, 1)).reshape(Co2, 9 * Cin)
    zero = jnp.zeros_like(w9)
    w_mat = jnp.concatenate(
        [jnp.concatenate([w9, zero, bias1[:, None]], axis=1),
         jnp.concatenate([zero, w9, bias2[:, None]], axis=1)], axis=0)

    lpad = ((2 * W + 2 + 127) // 128) * 128
    rpad = 2 * W + 2

    kernel = functools.partial(_shared_atrous_kernel, H=H, W=W)

    out_flat = pl.pallas_call(
        kernel,
        out_shape=jax.ShapeDtypeStruct((N, Cout, HW), x_nchw.dtype),
        grid_spec=pltpu.PrefetchScalarGridSpec(
            num_scalar_prefetch=0,
            grid=(N,),                         # one image per step; parallel over batch
            in_specs=[
                pl.BlockSpec((1, Cin, HW), lambda n: (n, 0, 0)),
                pl.BlockSpec((Cout, K), lambda n: (0, 0)),
            ],
            out_specs=pl.BlockSpec((1, Cout, HW), lambda n: (n, 0, 0)),
            scratch_shapes=[
                pltpu.VMEM((Cin, lpad + HW + rpad), jnp.float32),   # padded flat image
                pltpu.VMEM((K, HW), jnp.float32),                   # im2col patches
            ]),
        compiler_params=pltpu.CompilerParams(
            dimension_semantics=("parallel",),
            vmem_limit_bytes=48 * 1024 * 1024),
    )(x_flat, w_mat)

    # Free reshape back to NCHW; channel order = [dil1 | dil2] as in torch.cat.
    return out_flat.reshape(N, Cout, H, W)


def _reference(x_nchw, weights_oihw, bias1, bias2):
    """Pure-JAX reference (lax conv) for correctness checking."""
    dn = jax.lax.conv_dimension_numbers(x_nchw.shape, weights_oihw.shape,
                                        ('NCHW', 'OIHW', 'NCHW'))
    x1 = jax.lax.conv_general_dilated(
        x_nchw, weights_oihw, window_strides=(1, 1), padding='SAME',
        rhs_dilation=(1, 1), dimension_numbers=dn,
        precision=jax.lax.Precision.HIGHEST)
    x2 = jax.lax.conv_general_dilated(
        x_nchw, weights_oihw, window_strides=(1, 1), padding='SAME',
        rhs_dilation=(2, 2), dimension_numbers=dn,
        precision=jax.lax.Precision.HIGHEST)
    return jnp.concatenate([x1 + bias1[None, :, None, None],
                            x2 + bias2[None, :, None, None]], axis=1)


if __name__ == "__main__":
    # Small shapes consistent with the module: batch=2, in=4, out=8, 16x16 spatial.
    N, Cin, H, W = 2, 4, 16, 16
    out_channels = 8
    Co2 = out_channels // 2

    key = jax.random.PRNGKey(0)
    kx, kw, kb1, kb2 = jax.random.split(key, 4)

    # kaiming_uniform_(mode='fan_out', nonlinearity='relu'):
    fan_out = Co2 * 3 * 3
    bound = math.sqrt(2.0) * math.sqrt(3.0 / fan_out)
    weights = jax.random.uniform(kw, (Co2, Cin, 3, 3), minval=-bound, maxval=bound,
                                 dtype=jnp.float32)
    # Module inits biases to zero; use non-zero values here to exercise the fused bias.
    bias1 = 0.1 * jax.random.normal(kb1, (Co2,), dtype=jnp.float32)
    bias2 = 0.1 * jax.random.normal(kb2, (Co2,), dtype=jnp.float32)

    x = jax.random.normal(kx, (N, Cin, H, W), dtype=jnp.float32)

    out = jax.block_until_ready(jax.jit(shared_atrous_conv2d)(x, weights, bias1, bias2))
    ref = jax.block_until_ready(_reference(x, weights, bias1, bias2))

    assert out.shape == (N, out_channels, H, W)
    err = float(jnp.max(jnp.abs(out - ref)))
    assert jnp.allclose(out, ref, atol=2e-4, rtol=2e-4), err

    print("KERNEL_OK")
</pallas_src>

<mosaic_0001>
module attributes {stable_mosaic.version = 11 : i64} {
  func.func @_shared_atrous_kernel(%arg0: i32, %arg1: memref<1x4x256xf32, #tpu.memory_space<vmem>>, %arg2: memref<8x73xf32, #tpu.memory_space<vmem>>, %arg3: memref<1x8x256xf32, #tpu.memory_space<vmem>>, %arg4: memref<4x418xf32, #tpu.memory_space<vmem>>, %arg5: memref<73x256xf32, #tpu.memory_space<vmem>>) attributes {dimension_semantics = [#tpu.dimension_semantics<parallel>], iteration_bounds = array<i64: 2>, scalar_prefetch = 0 : i64, scratch_operands = 2 : i64, tpu.core_type = #tpu.core_type<tc>, window_params = [{transform_indices = @transform_0, window_bounds = array<i64: 1, 4, 256>}, {pipeline_mode = #tpu.pipeline_mode<synchronous>, transform_indices = @transform_1, window_bounds = array<i64: 8, 73>}, {transform_indices = @transform_2, window_bounds = array<i64: 1, 8, 256>}]} {
    %cst = arith.constant 0.000000e+00 : f32
    %0 = vector.broadcast %cst : f32 to vector<4x418xf32>
    %c0 = arith.constant 0 : index
    %c0_0 = arith.constant 0 : index
    %1 = vector.load %arg4[%c0, %c0_0] : memref<4x418xf32, #tpu.memory_space<vmem>>, vector<4x418xf32>
    tpu.vector_store %arg4[%c0, %c0_0], %0 {strides = array<i32>} : memref<4x418xf32, #tpu.memory_space<vmem>>, vector<4x418xf32>,
    %c0_1 = arith.constant 0 : index
    %c0_2 = arith.constant 0 : index
    %c0_3 = arith.constant 0 : index
    %2 = vector.load %arg1[%c0_1, %c0_2, %c0_3] : memref<1x4x256xf32, #tpu.memory_space<vmem>>, vector<1x4x256xf32>
    %3 = vector.shape_cast %2 : vector<1x4x256xf32> to vector<4x256xf32>
    %c0_4 = arith.constant 0 : index
    %c128 = arith.constant 128 : index
    %4 = vector.load %arg4[%c0_4, %c128] : memref<4x418xf32, #tpu.memory_space<vmem>>, vector<4x256xf32>
    tpu.vector_store %arg4[%c0_4, %c128], %3 {strides = array<i32>} : memref<4x418xf32, #tpu.memory_space<vmem>>, vector<4x256xf32>,
    %5 = tpu.iota {dimensions = array<i32: 1>} : vector<1x256xi32>
    %c15_i32 = arith.constant 15 : i32
    %6 = vector.broadcast %c15_i32 : i32 to vector<1x256xi32>
    %7 = arith.andi %5, %6 : vector<1x256xi32>
    %c0_5 = arith.constant 0 : index
    %c111 = arith.constant 111 : index
    %8 = vector.load %arg4[%c0_5, %c111] : memref<4x418xf32, #tpu.memory_space<vmem>>, vector<4x256xf32>
    %c1_i32 = arith.constant 1 : i32
    %9 = vector.broadcast %c1_i32 : i32 to vector<1x256xi32>
    %10 = arith.cmpi sge, %7, %9 : vector<1x256xi32>
    %cst_6 = arith.constant 0.000000e+00 : f32
    %11 = vector.shape_cast %10 : vector<1x256xi1> to vector<1x256xi1>
    %12 = vector.broadcast %11 : vector<1x256xi1> to vector<4x256xi1>
    %13 = vector.broadcast %cst_6 : f32 to vector<4x256xf32>
    %14 = arith.select %12, %8, %13 : vector<4x256xi1>, vector<4x256xf32>
    %c0_7 = arith.constant 0 : index
    %c0_8 = arith.constant 0 : index
    %15 = vector.load %arg5[%c0_7, %c0_8] : memref<73x256xf32, #tpu.memory_space<vmem>>, vector<4x256xf32>
    tpu.vector_store %arg5[%c0_7, %c0_8], %14 {strides = array<i32>} : memref<73x256xf32, #tpu.memory_space<vmem>>, vector<4x256xf32>,
    %c0_9 = arith.constant 0 : index
    %c112 = arith.constant 112 : index
    %16 = vector.load %arg4[%c0_9, %c112] : memref<4x418xf32, #tpu.memory_space<vmem>>, vector<4x256xf32>
    %c4 = arith.constant 4 : index
    %c0_10 = arith.constant 0 : index
    %17 = vector.load %arg5[%c4, %c0_10] : memref<73x256xf32, #tpu.memory_space<vmem>>, vector<4x256xf32>
    tpu.vector_store %arg5[%c4, %c0_10], %16 {strides = array<i32>} : memref<73x256xf32, #tpu.memory_space<vmem>>, vector<4x256xf32>,
    %c0_11 = arith.constant 0 : index
    %c113 = arith.constant 113 : index
    %18 = vector.load %arg4[%c0_11, %c113] : memref<4x418xf32, #tpu.memory_space<vmem>>, vector<4x256xf32>
    %c15_i32_12 = arith.constant 15 : i32
    %19 = vector.broadcast %c15_i32_12 : i32 to vector<1x256xi32>
    %20 = arith.cmpi slt, %7, %19 : vector<1x256xi32>
    %cst_13 = arith.constant 0.000000e+00 : f32
    %21 = vector.shape_cast %20 : vector<1x256xi1> to vector<1x256xi1>
    %22 = vector.broadcast %21 : vector<1x256xi1> to vector<4x256xi1>
    %23 = vector.broadcast %cst_13 : f32 to vector<4x256xf32>
    %24 = arith.select %22, %18, %23 : vector<4x256xi1>, vector<4x256xf32>
    %c8 = arith.constant 8 : index
    %c0_14 = arith.constant 0 : index
    %25 = vector.load %arg5[%c8, %c0_14] : memref<73x256xf32, #tpu.memory_space<vmem>>, vector<4x256xf32>
    tpu.vector_store %arg5[%c8, %c0_14], %24 {strides = array<i32>} : memref<73x256xf32, #tpu.memory_space<vmem>>, vector<4x256xf32>,
    %c0_15 = arith.constant 0 : index
    %c127 = arith.constant 127 : index
    %26 = vector.load %arg4[%c0_15, %c127] : memref<4x418xf32, #tpu.memory_space<vmem>>, vector<4x256xf32>
    %c1_i32_16 = arith.constant 1 : i32
    %27 = vector.broadcast %c1_i32_16 : i32 to vector<1x256xi32>
    %28 = arith.cmpi sge, %7, %27 : vector<1x256xi32>
    %cst_17 = arith.constant 0.000000e+00 : f32
    %29 = vector.shape_cast %28 : vector<1x256xi1> to vector<1x256xi1>
    %30 = vector.broadcast %29 : vector<1x256xi1> to vector<4x256xi1>
    %31 = vector.broadcast %cst_17 : f32 to vector<4x256xf32>
    %32 = arith.select %30, %26, %31 : vector<4x256xi1>, vector<4x256xf32>
    %c12 = arith.constant 12 : index
    %c0_18 = arith.constant 0 : index
    %33 = vector.load %arg5[%c12, %c0_18] : memref<73x256xf32, #tpu.memory_space<vmem>>, vector<4x256xf32>
    tpu.vector_store %arg5[%c12, %c0_18], %32 {strides = array<i32>} : memref<73x256xf32, #tpu.memory_space<vmem>>, vector<4x256xf32>,
    %c0_19 = arith.constant 0 : index
    %c128_20 = arith.constant 128 : index
    %34 = vector.load %arg4[%c0_19, %c128_20] : memref<4x418xf32, #tpu.memory_space<vmem>>, vector<4x256xf32>
    %c16 = arith.constant 16 : index
    %c0_21 = arith.constant 0 : index
    %35 = vector.load %arg5[%c16, %c0_21] : memref<73x256xf32, #tpu.memory_space<vmem>>, vector<4x256xf32>
    tpu.vector_store %arg5[%c16, %c0_21], %34 {strides = array<i32>} : memref<73x256xf32, #tpu.memory_space<vmem>>, vector<4x256xf32>,
    %c0_22 = arith.constant 0 : index
    %c129 = arith.constant 129 : index
    %36 = vector.load %arg4[%c0_22, %c129] : memref<4x418xf32, #tpu.memory_space<vmem>>, vector<4x256xf32>
    %c15_i32_23 = arith.constant 15 : i32
    %37 = vector.broadcast %c15_i32_23 : i32 to vector<1x256xi32>
    %38 = arith.cmpi slt, %7, %37 : vector<1x256xi32>
    %cst_24 = arith.constant 0.000000e+00 : f32
    %39 = vector.shape_cast %38 : vector<1x256xi1> to vector<1x256xi1>
    %40 = vector.broadcast %39 : vector<1x256xi1> to vector<4x256xi1>
    %41 = vector.broadcast %cst_24 : f32 to vector<4x256xf32>
    %42 = arith.select %40, %36, %41 : vector<4x256xi1>, vector<4x256xf32>
    %c20 = arith.constant 20 : index
    %c0_25 = arith.constant 0 : index
    %43 = vector.load %arg5[%c20, %c0_25] : memref<73x256xf32, #tpu.memory_space<vmem>>, vector<4x256xf32>
    tpu.vector_store %arg5[%c20, %c0_25], %42 {strides = array<i32>} : memref<73x256xf32, #tpu.memory_space<vmem>>, vector<4x256xf32>,
    %c0_26 = arith.constant 0 : index
    %c143 = arith.constant 143 : index
    %44 = vector.load %arg4[%c0_26, %c143] : memref<4x418xf32, #tpu.memory_space<vmem>>, vector<4x256xf32>
    %c1_i32_27 = arith.constant 1 : i32
    %45 = vector.broadcast %c1_i32_27 : i32 to vector<1x256xi32>
    %46 = arith.cmpi sge, %7, %45 : vector<1x256xi32>
    %cst_28 = arith.constant 0.000000e+00 : f32
    %47 = vector.shape_cast %46 : vector<1x256xi1> to vector<1x256xi1>
    %48 = vector.broadcast %47 : vector<1x256xi1> to vector<4x256xi1>
    %49 = vector.broadcast %cst_28 : f32 to vector<4x256xf32>
    %50 = arith.select %48, %44, %49 : vector<4x256xi1>, vector<4x256xf32>
    %c24 = arith.constant 24 : index
    %c0_29 = arith.constant 0 : index
    %51 = vector.load %arg5[%c24, %c0_29] : memref<73x256xf32, #tpu.memory_space<vmem>>, vector<4x256xf32>
    tpu.vector_store %arg5[%c24, %c0_29], %50 {strides = array<i32>} : memref<73x256xf32, #tpu.memory_space<vmem>>, vector<4x256xf32>,
    %c0_30 = arith.constant 0 : index
    %c144 = arith.constant 144 : index
    %52 = vector.load %arg4[%c0_30, %c144] : memref<4x418xf32, #tpu.memory_space<vmem>>, vector<4x256xf32>
    %c28 = arith.constant 28 : index
    %c0_31 = arith.constant 0 : index
    %53 = vector.load %arg5[%c28, %c0_31] : memref<73x256xf32, #tpu.memory_space<vmem>>, vector<4x256xf32>
    tpu.vector_store %arg5[%c28, %c0_31], %52 {strides = array<i32>} : memref<73x256xf32, #tpu.memory_space<vmem>>, vector<4x256xf32>,
    %c0_32 = arith.constant 0 : index
    %c145 = arith.constant 145 : index
    %54 = vector.load %arg4[%c0_32, %c145] : memref<4x418xf32, #tpu.memory_space<vmem>>, vector<4x256xf32>
    %c15_i32_33 = arith.constant 15 : i32
    %55 = vector.broadcast %c15_i32_33 : i32 to vector<1x256xi32>
    %56 = arith.cmpi slt, %7, %55 : vector<1x256xi32>
    %cst_34 = arith.constant 0.000000e+00 : f32
    %57 = vector.shape_cast %56 : vector<1x256xi1> to vector<1x256xi1>
    %58 = vector.broadcast %57 : vector<1x256xi1> to vector<4x256xi1>
    %59 = vector.broadcast %cst_34 : f32 to vector<4x256xf32>
    %60 = arith.select %58, %54, %59 : vector<4x256xi1>, vector<4x256xf32>
    %c32 = arith.constant 32 : index
    %c0_35 = arith.constant 0 : index
    %61 = vector.load %arg5[%c32, %c0_35] : memref<73x256xf32, #tpu.memory_space<vmem>>, vector<4x256xf32>
    tpu.vector_store %arg5[%c32, %c0_35], %60 {strides = array<i32>} : memref<73x256xf32, #tpu.memory_space<vmem>>, vector<4x256xf32>,
    %c0_36 = arith.constant 0 : index
    %c94 = arith.constant 94 : index
    %62 = vector.load %arg4[%c0_36, %c94] : memref<4x418xf32, #tpu.memory_space<vmem>>, vector<4x256xf32>
    %c2_i32 = arith.constant 2 : i32
    %63 = vector.broadcast %c2_i32 : i32 to vector<1x256xi32>
    %64 = arith.cmpi sge, %7, %63 : vector<1x256xi32>
    %cst_37 = arith.constant 0.000000e+00 : f32
    %65 = vector.shape_cast %64 : vector<1x256xi1> to vector<1x256xi1>
    %66 = vector.broadcast %65 : vector<1x256xi1> to vector<4x256xi1>
    %67 = vector.broadcast %cst_37 : f32 to vector<4x256xf32>
    %68 = arith.select %66, %62, %67 : vector<4x256xi1>, vector<4x256xf32>
    %c36 = arith.constant 36 : index
    %c0_38 = arith.constant 0 : index
    %69 = vector.load %arg5[%c36, %c0_38] : memref<73x256xf32, #tpu.memory_space<vmem>>, vector<4x256xf32>
    tpu.vector_store %arg5[%c36, %c0_38], %68 {strides = array<i32>} : memref<73x256xf32, #tpu.memory_space<vmem>>, vector<4x256xf32>,
    %c0_39 = arith.constant 0 : index
    %c96 = arith.constant 96 : index
    %70 = vector.load %arg4[%c0_39, %c96] : memref<4x418xf32, #tpu.memory_space<vmem>>, vector<4x256xf32>
    %c40 = arith.constant 40 : index
    %c0_40 = arith.constant 0 : index
    %71 = vector.load %arg5[%c40, %c0_40] : memref<73x256xf32, #tpu.memory_space<vmem>>, vector<4x256xf32>
    tpu.vector_store %arg5[%c40, %c0_40], %70 {strides = array<i32>} : memref<73x256xf32, #tpu.memory_space<vmem>>, vector<4x256xf32>,
    %c0_41 = arith.constant 0 : index
    %c98 = arith.constant 98 : index
    %72 = vector.load %arg4[%c0_41, %c98] : memref<4x418xf32, #tpu.memory_space<vmem>>, vector<4x256xf32>
    %c14_i32 = arith.constant 14 : i32
    %73 = vector.broadcast %c14_i32 : i32 to vector<1x256xi32>
    %74 = arith.cmpi slt, %7, %73 : vector<1x256xi32>
    %cst_42 = arith.constant 0.000000e+00 : f32
    %75 = vector.shape_cast %74 : vector<1x256xi1> to vector<1x256xi1>
    %76 = vector.broadcast %75 : vector<1x256xi1> to vector<4x256xi1>
    %77 = vector.broadcast %cst_42 : f32 to vector<4x256xf32>
    %78 = arith.select %76, %72, %77 : vector<4x256xi1>, vector<4x256xf32>
    %c44 = arith.constant 44 : index
    %c0_43 = arith.constant 0 : index
    %79 = vector.load %arg5[%c44, %c0_43] : memref<73x256xf32, #tpu.memory_space<vmem>>, vector<4x256xf32>
    tpu.vector_store %arg5[%c44, %c0_43], %78 {strides = array<i32>} : memref<73x256xf32, #tpu.memory_space<vmem>>, vector<4x256xf32>,
    %c0_44 = arith.constant 0 : index
    %c126 = arith.constant 126 : index
    %80 = vector.load %arg4[%c0_44, %c126] : memref<4x418xf32, #tpu.memory_space<vmem>>, vector<4x256xf32>
    %c2_i32_45 = arith.constant 2 : i32
    %81 = vector.broadcast %c2_i32_45 : i32 to vector<1x256xi32>
    %82 = arith.cmpi sge, %7, %81 : vector<1x256xi32>
    %cst_46 = arith.constant 0.000000e+00 : f32
    %83 = vector.shape_cast %82 : vector<1x256xi1> to vector<1x256xi1>
    %84 = vector.broadcast %83 : vector<1x256xi1> to vector<4x256xi1>
    %85 = vector.broadcast %cst_46 : f32 to vector<4x256xf32>
    %86 = arith.select %84, %80, %85 : vector<4x256xi1>, vector<4x256xf32>
    %c48 = arith.constant 48 : index
    %c0_47 = arith.constant 0 : index
    %87 = vector.load %arg5[%c48, %c0_47] : memref<73x256xf32, #tpu.memory_space<vmem>>, vector<4x256xf32>
    tpu.vector_store %arg5[%c48, %c0_47], %86 {strides = array<i32>} : memref<73x256xf32, #tpu.memory_space<vmem>>, vector<4x256xf32>,
    %c0_48 = arith.constant 0 : index
    %c128_49 = arith.constant 128 : index
    %88 = vector.load %arg4[%c0_48, %c128_49] : memref<4x418xf32, #tpu.memory_space<vmem>>, vector<4x256xf32>
    %c52 = arith.constant 52 : index
    %c0_50 = arith.constant 0 : index
    %89 = vector.load %arg5[%c52, %c0_50] : memref<73x256xf32, #tpu.memory_space<vmem>>, vector<4x256xf32>
    tpu.vector_store %arg5[%c52, %c0_50], %88 {strides = array<i32>} : memref<73x256xf32, #tpu.memory_space<vmem>>, vector<4x256xf32>,
    %c0_51 = arith.constant 0 : index
    %c130 = arith.constant 130 : index
    %90 = vector.load %arg4[%c0_51, %c130] : memref<4x418xf32, #tpu.memory_space<vmem>>, vector<4x256xf32>
    %c14_i32_52 = arith.constant 14 : i32
    %91 = vector.broadcast %c14_i32_52 : i32 to vector<1x256xi32>
    %92 = arith.cmpi slt, %7, %91 : vector<1x256xi32>
    %cst_53 = arith.constant 0.000000e+00 : f32
    %93 = vector.shape_cast %92 : vector<1x256xi1> to vector<1x256xi1>
    %94 = vector.broadcast %93 : vector<1x256xi1> to vector<4x256xi1>
    %95 = vector.broadcast %cst_53 : f32 to vector<4x256xf32>
    %96 = arith.select %94, %90, %95 : vector<4x256xi1>, vector<4x256xf32>
    %c56 = arith.constant 56 : index
    %c0_54 = arith.constant 0 : index
    %97 = vector.load %arg5[%c56, %c0_54] : memref<73x256xf32, #tpu.memory_space<vmem>>, vector<4x256xf32>
    tpu.vector_store %arg5[%c56, %c0_54], %96 {strides = array<i32>} : memref<73x256xf32, #tpu.memory_space<vmem>>, vector<4x256xf32>,
    %c0_55 = arith.constant 0 : index
    %c158 = arith.constant 158 : index
    %98 = vector.load %arg4[%c0_55, %c158] : memref<4x418xf32, #tpu.memory_space<vmem>>, vector<4x256xf32>
    %c2_i32_56 = arith.constant 2 : i32
    %99 = vector.broadcast %c2_i32_56 : i32 to vector<1x256xi32>
    %100 = arith.cmpi sge, %7, %99 : vector<1x256xi32>
    %cst_57 = arith.constant 0.000000e+00 : f32
    %101 = vector.shape_cast %100 : vector<1x256xi1> to vector<1x256xi1>
    %102 = vector.broadcast %101 : vector<1x256xi1> to vector<4x256xi1>
    %103 = vector.broadcast %cst_57 : f32 to vector<4x256xf32>
    %104 = arith.select %102, %98, %103 : vector<4x256xi1>, vector<4x256xf32>
    %c60 = arith.constant 60 : index
    %c0_58 = arith.constant 0 : index
    %105 = vector.load %arg5[%c60, %c0_58] : memref<73x256xf32, #tpu.memory_space<vmem>>, vector<4x256xf32>
    tpu.vector_store %arg5[%c60, %c0_58], %104 {strides = array<i32>} : memref<73x256xf32, #tpu.memory_space<vmem>>, vector<4x256xf32>,
    %c0_59 = arith.constant 0 : index
    %c160 = arith.constant 160 : index
    %106 = vector.load %arg4[%c0_59, %c160] : memref<4x418xf32, #tpu.memory_space<vmem>>, vector<4x256xf32>
    %c64 = arith.constant 64 : index
    %c0_60 = arith.constant 0 : index
    %107 = vector.load %arg5[%c64, %c0_60] : memref<73x256xf32, #tpu.memory_space<vmem>>, vector<4x256xf32>
    tpu.vector_store %arg5[%c64, %c0_60], %106 {strides = array<i32>} : memref<73x256xf32, #tpu.memory_space<vmem>>, vector<4x256xf32>,
    %c0_61 = arith.constant 0 : index
    %c162 = arith.constant 162 : index
    %108 = vector.load %arg4[%c0_61, %c162] : memref<4x418xf32, #tpu.memory_space<vmem>>, vector<4x256xf32>
    %c14_i32_62 = arith.constant 14 : i32
    %109 = vector.broadcast %c14_i32_62 : i32 to vector<1x256xi32>
    %110 = arith.cmpi slt, %7, %109 : vector<1x256xi32>
    %cst_63 = arith.constant 0.000000e+00 : f32
    %111 = vector.shape_cast %110 : vector<1x256xi1> to vector<1x256xi1>
    %112 = vector.broadcast %111 : vector<1x256xi1> to vector<4x256xi1>
    %113 = vector.broadcast %cst_63 : f32 to vector<4x256xf32>
    %114 = arith.select %112, %108, %113 : vector<4x256xi1>, vector<4x256xf32>
    %c68 = arith.constant 68 : index
    %c0_64 = arith.constant 0 : index
    %115 = vector.load %arg5[%c68, %c0_64] : memref<73x256xf32, #tpu.memory_space<vmem>>, vector<4x256xf32>
    tpu.vector_store %arg5[%c68, %c0_64], %114 {strides = array<i32>} : memref<73x256xf32, #tpu.memory_space<vmem>>, vector<4x256xf32>,
    %cst_65 = arith.constant 1.000000e+00 : f32
    %116 = vector.broadcast %cst_65 : f32 to vector<1x256xf32>
    %c72 = arith.constant 72 : index
    %c0_66 = arith.constant 0 : index
    %117 = vector.load %arg5[%c72, %c0_66] : memref<73x256xf32, #tpu.memory_space<vmem>>, vector<1x256xf32>
    tpu.vector_store %arg5[%c72, %c0_66], %116 {strides = array<i32>} : memref<73x256xf32, #tpu.memory_space<vmem>>, vector<1x256xf32>,
    %c0_67 = arith.constant 0 : index
    %c0_68 = arith.constant 0 : index
    %118 = vector.load %arg2[%c0_67, %c0_68] : memref<8x73xf32, #tpu.memory_space<vmem>>, vector<8x73xf32>
    %c0_69 = arith.constant 0 : index
    %c0_70 = arith.constant 0 : index
    %119 = vector.load %arg5[%c0_69, %c0_70] : memref<73x256xf32, #tpu.memory_space<vmem>>, vector<73x256xf32>
    %cst_71 = arith.constant dense<0.000000e+00> : vector<8x256xf32>
    %120 = tpu.matmul %118, %119, %cst_71 {dimension_numbers = #tpu.dot_dimension_numbers<[1], [0], [0], [1], [0, 0, 1, 1], [], []>} : vector<8x73xf32>, vector<73x256xf32>, vector<8x256xf32> -> vector<8x256xf32>
    %c0_72 = arith.constant 0 : index
    %c0_73 = arith.constant 0 : index
    %c0_74 = arith.constant 0 : index
    %121 = vector.load %arg3[%c0_72, %c0_73, %c0_74] : memref<1x8x256xf32, #tpu.memory_space<vmem>>, vector<1x8x256xf32>
    %122 = vector.shape_cast %121 : vector<1x8x256xf32> to vector<8x256xf32>
    %123 = vector.shape_cast %120 : vector<8x256xf32> to vector<1x8x256xf32>
    tpu.vector_store %arg3[%c0_72, %c0_73, %c0_74], %123 {strides = array<i32>} : memref<1x8x256xf32, #tpu.memory_space<vmem>>, vector<1x8x256xf32>,
    return
  }
  func.func @transform_0(%arg0: i32) -> (i32, i32, i32) {
    %c0_i32 = arith.constant 0 : i32
    %c0_i32_0 = arith.constant 0 : i32
    %c0_i32_1 = arith.constant 0 : i32
    return %arg0, %c0_i32, %c0_i32_0 : i32, i32, i32
  }
  func.func @transform_1(%arg0: i32) -> (i32, i32) {
    %c0_i32 = arith.constant 0 : i32
    %c0_i32_0 = arith.constant 0 : i32
    %c0_i32_1 = arith.constant 0 : i32
    return %c0_i32, %c0_i32_0 : i32, i32
  }
  func.func @transform_2(%arg0: i32) -> (i32, i32, i32) {
    %c0_i32 = arith.constant 0 : i32
    %c0_i32_0 = arith.constant 0 : i32
    %c0_i32_1 = arith.constant 0 : i32
    return %arg0, %c0_i32, %c0_i32_0 : i32, i32, i32
  }
}

</mosaic_0001>

<llo_original>
// kernel: shared_atrous_conv2d.1
$region0: #{shared_atrous_conv2d.1}
  #allocation0 [shape = 'u32[]', space=smem, size = 0x4, offset = 0x4, fixed_abs, tag = 'smem constant byte address 0x4 - core index']
  #allocation1 [shape = 'u32[144,128]{1,0:T(1,128)}', space=vmem, size = 0x12000, scoped, tag = 'internal scratch']
  #allocation2 [shape = 'f32[4,418]{1,0:T(4,128)}', space=vmem, size = 0x2000, scoped, tag = 'scratch operand']
  #allocation3 [shape = 'f32[73,256]{1,0:T(8,128)}', space=vmem, size = 0x14000, scoped, tag = 'scratch operand']
  %s0 = inlined_call_operand.vmem [shape: f32[2,4,256], index: 0, kind: input, shape index: {}]
  %s1 = inlined_call_operand.vmem [shape: f32[8,73], index: 1, kind: input, shape index: {}]
  %s2 = inlined_call_operand.vmem [shape: f32[2,8,256], index: 2, kind: output, shape index: {}]
  %s3 = sld [smem:[#allocation0]]
  $region41: #{shared_atrous_conv2d.1} parent=0
    _
  %s5 = ssub.s32 1, %s3
  %s6 = scalar_select 0, %s5, %s3
  loop: start=0, step=1, limit=4
  $region2: #{shared_atrous_conv2d.1} parent=0 // loop_pre_header
    _
  $region3: #{shared_atrous_conv2d.1} parent=0 // loop_header
    %s8 = sphi 0, %s12
    %p9 = scmp.ge.s32.totalorder %s8, 4
    %s18 = sphi 0, %s20
    %s21 = sphi 0, %s18
    %s22 = sphi 0, %s21
    %s38 = sphi 0, %s22
    %s42 = sphi 0, %s42
    %s44 = sphi 0, %s42
    %s45 = sphi 0, %s44
    %s59 = sphi 0, %s45
    %s65 = sphi 0, %s67
    %s68 = sphi 0, %s65
    %s69 = sphi 0, %s68
    %s85 = sphi 0, %s69
  $region4: #{shared_atrous_conv2d.1} parent=0 // loop_header_branch
    %11 = sbr.rel (%p9) target = $region8
  $region5: #{shared_atrous_conv2d.1} parent=0 // loop_body
    %s13 = ssub.s32 %s8, 1
    %s14 = ssub.s32 %s8, 2
    %s15 = sadd.s32 %s8, 1
    %s16 = ssub.s32 %s8, %s15
    %p17 = scmp.eq.s32.totalorder %s16, 0
    %s19 = sadd.s32 %s18, 1
    %s20 = scalar_select %p17, %s18, %s19
    %p23 = pneg %p17
    %p24 = scmp.eq.s32.totalorder %s8, 1
    %p25 = por %p23, %p24
    %p26 = scmp.ne.s32.totalorder %s18, %s21
    %p27 = scmp.eq.s32.totalorder %s8, 0
    %p28 = por %p26, %p27
    %p29 = scmp.ne.s32.totalorder %s18, %s21
    %p30 = scmp.eq.s32.totalorder %s13, 1
    %p31 = por %p29, %p30
    %p32 = scmp.ne.s32.totalorder %s21, %s22
    %p33 = scmp.eq.s32.totalorder %s13, 0
    %p34 = por %p32, %p33
    %p35 = scmp.ne.s32.totalorder %s21, %s22
    %p36 = scmp.eq.s32.totalorder %s14, 1
    %p37 = por %p35, %p36
    %p39 = scmp.ne.s32.totalorder %s22, %s38
    %p40 = scmp.eq.s32.totalorder %s14, 0
    %p41 = por %p39, %p40
    %s43 = sadd.s32 %s42, 1
    %p46 = scmp.eq.s32.totalorder %s8, 1
    %p47 = scmp.ne.s32.totalorder %s42, %s44
    %p48 = scmp.eq.s32.totalorder %s8, 0
    %p49 = por %p47, %p48
    %p50 = scmp.ne.s32.totalorder %s42, %s44
    %p51 = scmp.eq.s32.totalorder %s13, 1
    %p52 = por %p50, %p51
    %p53 = scmp.ne.s32.totalorder %s44, %s45
    %p54 = scmp.eq.s32.totalorder %s13, 0
    %p55 = por %p53, %p54
    %p56 = scmp.ne.s32.totalorder %s44, %s45
    %p57 = scmp.eq.s32.totalorder %s14, 1
    %p58 = por %p56, %p57
    %p60 = scmp.ne.s32.totalorder %s45, %s59
    %p61 = scmp.eq.s32.totalorder %s14, 0
    %p62 = por %p60, %p61
    %s63 = ssub.s32 %s8, %s15
    %p64 = scmp.eq.s32.totalorder %s63, 0
    %s66 = sadd.s32 %s65, 1
    %s67 = scalar_select %p64, %s65, %s66
    %p70 = pneg %p64
    %p71 = scmp.eq.s32.totalorder %s8, 1
    %p72 = por %p70, %p71
    %p73 = scmp.ne.s32.totalorder %s65, %s68
    %p74 = scmp.eq.s32.totalorder %s8, 0
    %p75 = por %p73, %p74
    %p76 = scmp.ne.s32.totalorder %s65, %s68
    %p77 = scmp.eq.s32.totalorder %s13, 1
    %p78 = por %p76, %p77
    %p79 = scmp.ne.s32.totalorder %s68, %s69
    %p80 = scmp.eq.s32.totalorder %s13, 0
    %p81 = por %p79, %p80
    %p82 = scmp.ne.s32.totalorder %s68, %s69
    %p83 = scmp.eq.s32.totalorder %s14, 1
    %p84 = por %p82, %p83
    %p86 = scmp.ne.s32.totalorder %s69, %s85
    %p87 = scmp.eq.s32.totalorder %s14, 0
    %p88 = por %p86, %p87
    %p89 = scmp.le.s32.totalorder 1, %s8
    %p90 = scmp.lt.s32.totalorder %s8, 3
    %p91 = pnand %p89, %p90
    %p92 = pneg %p91
    // Predicated region
    $region9: #{shared_atrous_conv2d.1} parent=5 // pred_check
      _
    $region10: #{shared_atrous_conv2d.1} parent=5 // pred_check_branch
      %94 = sbr.rel (%p91) target = $region12
    $region11: #{shared_atrous_conv2d.1} parent=5 // pred_region
      %s95 = ssub.s32 %s8, 1
      // Predicated region
      $region13: #{shared_atrous_conv2d.1} parent=11 // pred_check
        %p96 = pneg %p55
      $region14: #{shared_atrous_conv2d.1} parent=11 // pred_check_branch
        %98 = sbr.rel (%p96) target = $region16
      $region15: #{shared_atrous_conv2d.1} parent=11 // pred_region
        _
      $region16: #{shared_atrous_conv2d.1} parent=11 // pred_fallthru
        _
    $region12: #{shared_atrous_conv2d.1} parent=5 // pred_fallthru
      _
    %p99 = scmp.lt.s32.totalorder %s8, 2
    // Predicated region
    $region17: #{shared_atrous_conv2d.1} parent=5 // pred_check
      %p100 = pneg %p99
    $region18: #{shared_atrous_conv2d.1} parent=5 // pred_check_branch
      %102 = sbr.rel (%p100) target = $region20
    $region19: #{shared_atrous_conv2d.1} parent=5 // pred_region
      // Predicated region
      $region21: #{shared_atrous_conv2d.1} parent=19 // pred_check
        %p103 = pneg %p28
      $region22: #{shared_atrous_conv2d.1} parent=19 // pred_check_branch
        %105 = sbr.rel (%p103) target = $region24
      $region23: #{shared_atrous_conv2d.1} parent=19 // pred_region
        %p106 = scmp.lt.s32.totalorder %s8, 1
        %s107 = scalar_select %p106, %s8, 1
        %s108 = smul.addr %s107, 2
        %s109 = smul.addr %s108, 4
        %s110 = scalar_lea.vmem %s0, %s109
      $region24: #{shared_atrous_conv2d.1} parent=19 // pred_fallthru
        _
    $region20: #{shared_atrous_conv2d.1} parent=5 // pred_fallthru
      _
    %p111 = scmp.le.s32.totalorder 1, %s8
    %p112 = scmp.lt.s32.totalorder %s8, 3
    %p113 = pnand %p111, %p112
    %p114 = pneg %p113
    // Predicated region
    $region25: #{shared_atrous_conv2d.1} parent=5 // pred_check
      _
    $region26: #{shared_atrous_conv2d.1} parent=5 // pred_check_branch
      %116 = sbr.rel (%p113) target = $region28
    $region27: #{shared_atrous_conv2d.1} parent=5 // pred_region
      %s117 = ssub.s32 %s8, 1
      %p118 = scmp.lt.s32.totalorder %s13, 1
      %s119 = scalar_select %p118, %s13, 1
      %s120 = smul.addr %s119, 2
      %s121 = smul.addr %s120, 4
      %s122 = scalar_lea.vmem %s0, %s121
      %p123 = pneg %p34
      %p124 = pneg %p31
      %p125 = pneg %p55
      %p126 = pneg %p52
      %p127 = pneg %p81
      %p128 = pneg %p78
      %p129 = scmp.lt.s32.totalorder %s13, 1
      %s130 = scalar_select %p129, %s13, 1
      %s131 = smul.addr %s130, 2
      %s132 = smul.addr %s131, 8
      %s133 = scalar_lea.vmem %s2, %s132
      %p134 = scmp.lt.s32.totalorder %s13, 1
      %s135 = scalar_select %p134, %s13, 1
      %s136 = smul.addr %s135, 2
      %s137 = smul.addr %s136, 4
      %s138 = scalar_lea.vmem %s0, %s137
      %p139 = scmp.lt.s32.totalorder %s13, 1
      %s140 = scalar_select %p139, %s13, 1
      %s141 = smul.addr %s140, 2
      %s142 = smul.addr %s141, 8
      %s143 = scalar_lea.vmem %s2, %s142
      %144 = vst [vmem:[#allocation2] sm:$0xff] 0.0
      %vm145 = vcmask 1043456
      %vm146 = vcmask 277508
      %vm147 = vmor %vm146, %vm145
      %148 = vst.msk [vmem:[#allocation2 + $0x8] sm:$0xff] %vm147, 0.0
      %v149 = vld [vmem:[%s138] sm:$0xff]
      %150 = vst [vmem:[#allocation2 + $0x4] sm:$0xff] %v149
      %v151 = vlaneseq
      %v152 = vand.u32 %v151, 127
      %v153 = vadd.s32 %v152, 128
      %v154 = vand.u32 %v152, 15
      %v155 = vand.u32 %v153, 15
      %v156 = vld [vmem:[#allocation2] sm:$0xff]
      %v157 = vld [vmem:[#allocation2 + $0x8] sm:$0xf]
      %vm158 = vcmp.ge.s32.totalorder %v154, 1
      %vm159 = vcmp.ge.s32.totalorder %v155, 1
      %v160 = vsel %vm158, 1, 0
      %v161 = vsel %vm159, 1, 0
      %vm162 = vcmp.eq.s32.totalorder %v160, 1
      %vm163 = vcmp.eq.s32.totalorder %v161, 1
      %v166 = vcombine.high %v156, %v156
      %167 = vrot.lane.b32.xlu0 %v156, 17
      %v168 = vpop.permute.xlu0 %167
      %169 = vrot.lane.b32.xlu0 %v166, 17
      %v170 = vpop.permute.xlu0 %169
      %171 = vrot.lane.b32.xlu0 %v157, 17
      %v172 = vpop.permute.xlu0 %171
      %vm173 = vcmask 138240
      %v174 = vsel %vm173, %v168, %v170
      %v175 = vsel %vm173, %v170, %v172
      %v178 = vsel %vm162, %v174, 0.0
      %v179 = vsel %vm163, %v175, 0.0
      %180 = vst [vmem:[#allocation3] sm:$0xf] %v178
      %181 = vst [vmem:[#allocation3 + $0x8] sm:$0xf] %v179
      %v182 = vld [vmem:[#allocation2] sm:$0xff]
      %v183 = vld [vmem:[#allocation2 + $0x8] sm:$0xf]
      %v186 = vcombine.low %v182, %v182
      %v187 = vcombine.low %v183, %v183
      %188 = vrot.lane.b32.xlu0 %v186, 16
      %v189 = vpop.permute.xlu0 %188
      %190 = vrot.lane.b32.xlu0 %v182, 16
      %v191 = vpop.permute.xlu0 %190
      %192 = vrot.lane.b32.xlu0 %v187, 16
      %v193 = vpop.permute.xlu0 %192
      %vm194 = vcmask 130048
      %v195 = vsel %vm194, %v189, %v191
      %v196 = vsel %vm194, %v191, %v193
      %199 = vst [vmem:[#allocation3] sm:$0xf0] %v195
      %200 = vst [vmem:[#allocation3 + $0x8] sm:$0xf0] %v196
      %v201 = vld [vmem:[#allocation2] sm:$0xff]
      %v202 = vld [vmem:[#allocation2 + $0x8] sm:$0xf]
      %vm203 = vcmp.lt.s32.totalorder %v154, 15
      %vm204 = vcmp.lt.s32.totalorder %v155, 15
      %v205 = vsel %vm203, 1, 0
      %v206 = vsel %vm204, 1, 0
      %vm207 = vcmp.eq.s32.totalorder %v205, 1
      %vm208 = vcmp.eq.s32.totalorder %v206, 1
      %v211 = vcombine.high %v201, %v201
      %212 = vrot.lane.b32.xlu0 %v201, 15
      %v213 = vpop.permute.xlu0 %212
      %214 = vrot.lane.b32.xlu0 %v211, 15
      %v215 = vpop.permute.xlu0 %214
      %216 = vrot.lane.b32.xlu0 %v202, 15
      %v217 = vpop.permute.xlu0 %216
      %vm218 = vcmask 121856
      %v219 = vsel %vm218, %v213, %v215
      %v220 = vsel %vm218, %v215, %v217
      %v223 = vsel %vm207, %v219, 0.0
      %v224 = vsel %vm208, %v220, 0.0
      %225 = vst [vmem:[#allocation3 + $0x10] sm:$0xf] %v223
      %226 = vst [vmem:[#allocation3 + $0x18] sm:$0xf] %v224
      %v227 = vld [vmem:[#allocation2] sm:$0xff]
      %v228 = vld [vmem:[#allocation2 + $0x8] sm:$0xf]
      %v231 = vcombine.high %v227, %v227
      %232 = vrot.lane.b32.xlu0 %v227, 1
      %v233 = vpop.permute.xlu0 %232
      %234 = vrot.lane.b32.xlu0 %v231, 1
      %v235 = vpop.permute.xlu0 %234
      %236 = vrot.lane.b32.xlu0 %v228, 1
      %v237 = vpop.permute.xlu0 %236
      %vm238 = vcmask 7168
      %v239 = vsel %vm238, %v233, %v235
      %v240 = vsel %vm238, %v235, %v237
      %v243 = vsel %vm162, %v239, 0.0
      %v244 = vsel %vm163, %v240, 0.0
      %v247 = vrot.slane %v243, 4
      %v248 = vrot.slane %v244, 4
      %251 = vst [vmem:[#allocation3 + $0x10] sm:$0xf0] %v247
      %252 = vst [vmem:[#allocation3 + $0x18] sm:$0xf0] %v248
      %v253 = vld [vmem:[#allocation2 + $0x4] sm:$0xff]
      %v255 = vcombine.high %v253, %v253
      %257 = vst [vmem:[#allocation3 + $0x20] sm:$0xf] %v253
      %258 = vst [vmem:[#allocation3 + $0x28] sm:$0xf] %v255
      %v259 = vld [vmem:[#allocation2 + $0x4] sm:$0xff]
      %v260 = vld [vmem:[#allocation2 + $0xc] sm:$0xf]
      %v263 = vcombine.high %v259, %v259
      %264 = vrot.lane.b32.xlu0 %v259, 127
      %v265 = vpop.permute.xlu0 %264
      %266 = vrot.lane.b32.xlu0 %v263, 127
      %v267 = vpop.permute.xlu0 %266
      %268 = vrot.lane.b32.xlu0 %v260, 127
      %v269 = vpop.permute.xlu0 %268
      %vm270 = vcmask 1039360
      %v271 = vsel %vm270, %v265, %v267
      %v272 = vsel %vm270, %v267, %v269
      %v275 = vsel %vm207, %v271, 0.0
      %v276 = vsel %vm208, %v272, 0.0
      %v279 = vrot.slane %v275, 4
      %v280 = vrot.slane %v276, 4
      %283 = vst [vmem:[#allocation3 + $0x20] sm:$0xf0] %v279
      %284 = vst [vmem:[#allocation3 + $0x28] sm:$0xf0] %v280
      %v285 = vld [vmem:[#allocation2 + $0x4] sm:$0xff]
      %v286 = vld [vmem:[#allocation2 + $0xc] sm:$0xf]
      %v289 = vcombine.high %v285, %v285
      %290 = vrot.lane.b32.xlu0 %v285, 113
      %v291 = vpop.permute.xlu0 %290
      %292 = vrot.lane.b32.xlu0 %v289, 113
      %v293 = vpop.permute.xlu0 %292
      %294 = vrot.lane.b32.xlu0 %v286, 113
      %v295 = vpop.permute.xlu0 %294
      %vm296 = vcmask 924672
      %v297 = vsel %vm296, %v291, %v293
      %v298 = vsel %vm296, %v293, %v295
      %v301 = vsel %vm162, %v297, 0.0
      %v302 = vsel %vm163, %v298, 0.0
      %303 = vst [vmem:[#allocation3 + $0x30] sm:$0xf] %v301
      %304 = vst [vmem:[#allocation3 + $0x38] sm:$0xf] %v302
      %v305 = vld [vmem:[#allocation2 + $0x4] sm:$0xff]
      %v306 = vld [vmem:[#allocation2 + $0xc] sm:$0xf]
      %v309 = vcombine.low %v305, %v305
      %v310 = vcombine.low %v306, %v306
      %311 = vrot.lane.b32.xlu0 %v309, 112
      %v312 = vpop.permute.xlu0 %311
      %313 = vrot.lane.b32.xlu0 %v305, 112
      %v314 = vpop.permute.xlu0 %313
      %315 = vrot.lane.b32.xlu0 %v310, 112
      %v316 = vpop.permute.xlu0 %315
      %vm317 = vcmask 916480
      %v318 = vsel %vm317, %v312, %v314
      %v319 = vsel %vm317, %v314, %v316
      %322 = vst [vmem:[#allocation3 + $0x30] sm:$0xf0] %v318
      %323 = vst [vmem:[#allocation3 + $0x38] sm:$0xf0] %v319
      %v324 = vld [vmem:[#allocation2 + $0x4] sm:$0xff]
      %v325 = vld [vmem:[#allocation2 + $0xc] sm:$0xf]
      %v328 = vcombine.high %v324, %v324
      %329 = vrot.lane.b32.xlu0 %v324, 111
      %v330 = vpop.permute.xlu0 %329
      %331 = vrot.lane.b32.xlu0 %v328, 111
      %v332 = vpop.permute.xlu0 %331
      %333 = vrot.lane.b32.xlu0 %v325, 111
      %v334 = vpop.permute.xlu0 %333
      %vm335 = vcmask 908288
      %v336 = vsel %vm335, %v330, %v332
      %v337 = vsel %vm335, %v332, %v334
      %v340 = vsel %vm207, %v336, 0.0
      %v341 = vsel %vm208, %v337, 0.0
      %342 = vst [vmem:[#allocation3 + $0x40] sm:$0xf] %v340
      %343 = vst [vmem:[#allocation3 + $0x48] sm:$0xf] %v341
      %v344 = vld [vmem:[#allocation2] sm:$0xff]
      %v345 = vld [vmem:[#allocation2 + $0x8] sm:$0xf]
      %vm346 = vcmp.ge.s32.totalorder %v154, 2
      %vm347 = vcmp.ge.s32.totalorder %v155, 2
      %v348 = vsel %vm346, 1, 0
      %v349 = vsel %vm347, 1, 0
      %vm350 = vcmp.eq.s32.totalorder %v348, 1
      %vm351 = vcmp.eq.s32.totalorder %v349, 1
      %v354 = vcombine.high %v344, %v344
      %355 = vrot.lane.b32.xlu0 %v344, 34
      %v356 = vpop.permute.xlu0 %355
      %357 = vrot.lane.b32.xlu0 %v354, 34
      %v358 = vpop.permute.xlu0 %357
      %359 = vrot.lane.b32.xlu0 %v345, 34
      %v360 = vpop.permute.xlu0 %359
      %vm361 = vcmask 277504
      %v362 = vsel %vm361, %v356, %v358
      %v363 = vsel %vm361, %v358, %v360
      %v366 = vsel %vm350, %v362, 0.0
      %v367 = vsel %vm351, %v363, 0.0
      %v370 = vrot.slane %v366, 4
      %v371 = vrot.slane %v367, 4
      %374 = vst [vmem:[#allocation3 + $0x40] sm:$0xf0] %v370
      %375 = vst [vmem:[#allocation3 + $0x48] sm:$0xf0] %v371
      %v376 = vld [vmem:[#allocation2] sm:$0xff]
      %v377 = vld [vmem:[#allocation2 + $0x8] sm:$0xf]
      %v380 = vcombine.high %v376, %v376
      %381 = vrot.lane.b32.xlu0 %v376, 32
      %v382 = vpop.permute.xlu0 %381
      %383 = vrot.lane.b32.xlu0 %v380, 32
      %v384 = vpop.permute.xlu0 %383
      %385 = vrot.lane.b32.xlu0 %v377, 32
      %v386 = vpop.permute.xlu0 %385
      %vm387 = vcmask 261120
      %v388 = vsel %vm387, %v382, %v384
      %v389 = vsel %vm387, %v384, %v386
      %392 = vst [vmem:[#allocation3 + $0x50] sm:$0xf] %v388
      %393 = vst [vmem:[#allocation3 + $0x58] sm:$0xf] %v389
      %v394 = vld [vmem:[#allocation2] sm:$0xff]
      %v395 = vld [vmem:[#allocation2 + $0x8] sm:$0xf]
      %vm396 = vcmp.lt.s32.totalorder %v154, 14
      %vm397 = vcmp.lt.s32.totalorder %v155, 14
      %v398 = vsel %vm396, 1, 0
      %v399 = vsel %vm397, 1, 0
      %vm400 = vcmp.eq.s32.totalorder %v398, 1
      %vm401 = vcmp.eq.s32.totalorder %v399, 1
      %v404 = vcombine.high %v394, %v394
      %405 = vrot.lane.b32.xlu0 %v394, 30
      %v406 = vpop.permute.xlu0 %405
      %407 = vrot.lane.b32.xlu0 %v404, 30
      %v408 = vpop.permute.xlu0 %407
      %409 = vrot.lane.b32.xlu0 %v395, 30
      %v410 = vpop.permute.xlu0 %409
      %vm411 = vcmask 244736
      %v412 = vsel %vm411, %v406, %v408
      %v413 = vsel %vm411, %v408, %v410
      %v416 = vsel %vm400, %v412, 0.0
      %v417 = vsel %vm401, %v413, 0.0
      %v420 = vrot.slane %v416, 4
      %v421 = vrot.slane %v417, 4
      %424 = vst [vmem:[#allocation3 + $0x50] sm:$0xf0] %v420
      %425 = vst [vmem:[#allocation3 + $0x58] sm:$0xf0] %v421
      %v426 = vld [vmem:[#allocation2] sm:$0xff]
      %v427 = vld [vmem:[#allocation2 + $0x8] sm:$0xf]
      %v430 = vcombine.high %v426, %v426
      %431 = vrot.lane.b32.xlu0 %v426, 2
      %v432 = vpop.permute.xlu0 %431
      %433 = vrot.lane.b32.xlu0 %v430, 2
      %v434 = vpop.permute.xlu0 %433
      %435 = vrot.lane.b32.xlu0 %v427, 2
      %v436 = vpop.permute.xlu0 %435
      %vm437 = vcmask 15360
      %v438 = vsel %vm437, %v432, %v434
      %v439 = vsel %vm437, %v434, %v436
      %v442 = vsel %vm350, %v438, 0.0
      %v443 = vsel %vm351, %v439, 0.0
      %444 = vst [vmem:[#allocation3 + $0x60] sm:$0xf] %v442
      %445 = vst [vmem:[#allocation3 + $0x68] sm:$0xf] %v443
      %v446 = vld [vmem:[#allocation2 + $0x4] sm:$0xff]
      %v448 = vcombine.low %v446, %v446
      %450 = vst [vmem:[#allocation3 + $0x60] sm:$0xf0] %v448
      %451 = vst [vmem:[#allocation3 + $0x68] sm:$0xf0] %v446
      %v452 = vld [vmem:[#allocation2 + $0x4] sm:$0xff]
      %v453 = vld [vmem:[#allocation2 + $0xc] sm:$0xf]
      %v456 = vcombine.high %v452, %v452
      %457 = vrot.lane.b32.xlu0 %v452, 126
      %v458 = vpop.permute.xlu0 %457
      %459 = vrot.lane.b32.xlu0 %v456, 126
      %v460 = vpop.permute.xlu0 %459
      %461 = vrot.lane.b32.xlu0 %v453, 126
      %v462 = vpop.permute.xlu0 %461
      %vm463 = vcmask 1031168
      %v464 = vsel %vm463, %v458, %v460
      %v465 = vsel %vm463, %v460, %v462
      %v468 = vsel %vm400, %v464, 0.0
      %v469 = vsel %vm401, %v465, 0.0
      %470 = vst [vmem:[#allocation3 + $0x70] sm:$0xf] %v468
      %471 = vst [vmem:[#allocation3 + $0x78] sm:$0xf] %v469
      %v472 = vld [vmem:[#allocation2 + $0x4] sm:$0xff]
      %v473 = vld [vmem:[#allocation2 + $0xc] sm:$0xf]
      %v476 = vcombine.high %v472, %v472
      %477 = vrot.lane.b32.xlu0 %v472, 98
      %v478 = vpop.permute.xlu0 %477
      %479 = vrot.lane.b32.xlu0 %v476, 98
      %v480 = vpop.permute.xlu0 %479
      %481 = vrot.lane.b32.xlu0 %v473, 98
      %v482 = vpop.permute.xlu0 %481
      %vm483 = vcmask 801792
      %v484 = vsel %vm483, %v478, %v480
      %v485 = vsel %vm483, %v480, %v482
      %v488 = vsel %vm350, %v484, 0.0
      %v489 = vsel %vm351, %v485, 0.0
      %v492 = vrot.slane %v488, 4
      %v493 = vrot.slane %v489, 4
      %496 = vst [vmem:[#allocation3 + $0x70] sm:$0xf0] %v492
      %497 = vst [vmem:[#allocation3 + $0x78] sm:$0xf0] %v493
      %v498 = vld [vmem:[#allocation2 + $0x4] sm:$0xff]
      %v499 = vld [vmem:[#allocation2 + $0xc] sm:$0xf]
      %v502 = vcombine.high %v498, %v498
      %503 = vrot.lane.b32.xlu0 %v498, 96
      %v504 = vpop.permute.xlu0 %503
      %505 = vrot.lane.b32.xlu0 %v502, 96
      %v506 = vpop.permute.xlu0 %505
      %507 = vrot.lane.b32.xlu0 %v499, 96
      %v508 = vpop.permute.xlu0 %507
      %vm509 = vcmask 785408
      %v510 = vsel %vm509, %v504, %v506
      %v511 = vsel %vm509, %v506, %v508
      %514 = vst [vmem:[#allocation3 + $0x80] sm:$0xf] %v510
      %515 = vst [vmem:[#allocation3 + $0x88] sm:$0xf] %v511
      %v516 = vld [vmem:[#allocation2 + $0x4] sm:$0xff]
      %v517 = vld [vmem:[#allocation2 + $0xc] sm:$0xf]
      %v520 = vcombine.high %v516, %v516
      %521 = vrot.lane.b32.xlu0 %v516, 94
      %v522 = vpop.permute.xlu0 %521
      %523 = vrot.lane.b32.xlu0 %v520, 94
      %v524 = vpop.permute.xlu0 %523
      %525 = vrot.lane.b32.xlu0 %v517, 94
      %v526 = vpop.permute.xlu0 %525
      %vm527 = vcmask 769024
      %v528 = vsel %vm527, %v522, %v524
      %v529 = vsel %vm527, %v524, %v526
      %v532 = vsel %vm400, %v528, 0.0
      %v533 = vsel %vm401, %v529, 0.0
      %v536 = vrot.slane %v532, 4
      %v537 = vrot.slane %v533, 4
      %540 = vst [vmem:[#allocation3 + $0x80] sm:$0xf0] %v536
      %541 = vst [vmem:[#allocation3 + $0x88] sm:$0xf0] %v537
      %v542 = vlaneseq
      %vm543 = vcmp.ge.s32.totalorder %v542, 0
      %vm544 = vcmp.lt.s32.totalorder %v542, 256
      %vm545 = vmand %vm543, %vm544
      %s546 = scalar_lea.vmem [#allocation3], 144
      %547 = vst.msk [vmem:[%s546] ss:$8 sm:$0x3] %vm545, 1.0
      %548 = vst.msk [vmem:[%s546] ss:$8 sm:$0x0] %vm545, 1.0
      %v549 = vld [vmem:[%s1] sm:$0xff]
      %v550 = vld [vmem:[#allocation3] sm:$0xff]
      %v551 = vld [vmem:[#allocation3 + $0x8] sm:$0xff]
      %v552 = vld [vmem:[#allocation3 + $0x10] sm:$0xff]
      %v553 = vld [vmem:[#allocation3 + $0x18] sm:$0xff]
      %v554 = vld [vmem:[#allocation3 + $0x20] sm:$0xff]
      %v555 = vld [vmem:[#allocation3 + $0x28] sm:$0xff]
      %v556 = vld [vmem:[#allocation3 + $0x30] sm:$0xff]
      %v557 = vld [vmem:[#allocation3 + $0x38] sm:$0xff]
      %v558 = vld [vmem:[#allocation3 + $0x40] sm:$0xff]
      %v559 = vld [vmem:[#allocation3 + $0x48] sm:$0xff]
      %v560 = vld [vmem:[#allocation3 + $0x50] sm:$0xff]
      %v561 = vld [vmem:[#allocation3 + $0x58] sm:$0xff]
      %v562 = vld [vmem:[#allocation3 + $0x60] sm:$0xff]
      %v563 = vld [vmem:[#allocation3 + $0x68] sm:$0xff]
      %v564 = vld [vmem:[#allocation3 + $0x70] sm:$0xff]
      %v565 = vld [vmem:[#allocation3 + $0x78] sm:$0xff]
      %v566 = vld [vmem:[#allocation3 + $0x80] sm:$0xff]
      %v567 = vld [vmem:[#allocation3 + $0x88] sm:$0xff]
      %v568 = vld [vmem:[#allocation3 + $0x90] sm:$0x1]
      %v569 = vld [vmem:[#allocation3 + $0x98] sm:$0x1]
      %vm570 = vcmask 596992
      %v572 = vsel %vm570, %v549, 0
      %vm574 = vcmask 1040384
      %v576 = vsel %vm574, %v568, 0
      %v579 = vsel %vm574, %v569, 0
      %581 = vmatprep.subr.mxu0 0.0
      %582 = vmatpush1.msra.mxu0 0.0
      %583 = vmatprep.subr.mxu0 0.0
      %584 = vmatpush1.msra.mxu0 0.0
      %585 = vmatprep.subr.mxu0 0.0
      %586 = vmatpush1.msra.mxu0 0.0
      %587 = vmatprep.subr.mxu0 0.0
      %588 = vmatpush1.msra.mxu0 0.0
      %589 = vmatprep.subr.mxu0 0.0
      %590 = vmatpush1.msra.mxu0 0.0
      %591 = vmatprep.subr.mxu0 0.0
      %592 = vmatpush1.msra.mxu0 0.0
      %593 = vmatprep.subr.mxu0 %v579
      %594 = vmatpush1.msra.mxu0 %v576
      %595 = vmatprep.subr.mxu0 %v567
      %596 = vmatpush1.msra.mxu0 %v566
      %597 = vmatprep.subr.mxu0 %v565
      %598 = vmatpush1.msra.mxu0 %v564
      %599 = vmatprep.subr.mxu0 %v563
      %600 = vmatpush1.msra.mxu0 %v562
      %601 = vmatprep.subr.mxu0 %v561
      %602 = vmatpush1.msra.mxu0 %v560
      %603 = vmatprep.subr.mxu0 %v559
      %604 = vmatpush1.msra.mxu0 %v558
      %605 = vmatprep.subr.mxu0 %v557
      %606 = vmatpush1.msra.mxu0 %v556
      %607 = vmatprep.subr.mxu0 %v555
      %608 = vmatpush1.msra.mxu0 %v554
      %609 = vmatprep.subr.mxu0 %v553
      %610 = vmatpush1.msra.mxu0 %v552
      %611 = vmatprep.subr.mxu0 %v551
      %612 = vmatpush1.msra.mxu0 %v550
      %613 = vmatprep.subr.mxu0 0.0
      %614 = vmatpush2.msra.mxu0 0.0
      %615 = vmatprep.subr.mxu0 0.0
      %616 = vmatpush2.msra.mxu0 0.0
      %617 = vmatprep.subr.mxu0 0.0
      %618 = vmatpush2.msra.mxu0 0.0
      %619 = vmatprep.subr.mxu0 0.0
      %620 = vmatpush2.msra.mxu0 0.0
      %621 = vmatprep.subr.mxu0 0.0
      %622 = vmatpush2.msra.mxu0 0.0
      %623 = vmatprep.subr.mxu0 0.0
      %624 = vmatpush2.msra.mxu0 0.0
      %625 = vmatprep.subr.mxu0 0.0
      %626 = vmatpush2.msra.mxu0 0.0
      %627 = vmatprep.subr.mxu0 0.0
      %628 = vmatpush2.msra.mxu0 0.0
      %629 = vmatprep.subr.mxu0 0.0
      %630 = vmatpush2.msra.mxu0 0.0
      %631 = vmatprep.subr.mxu0 0.0
      %632 = vmatpush2.msra.mxu0 0.0
      %633 = vmatprep.subr.mxu0 0.0
      %634 = vmatpush2.msra.mxu0 0.0
      %635 = vmatprep.subr.mxu0 0.0
      %636 = vmatpush2.msra.mxu0 0.0
      %637 = vmatprep.subr.mxu0 0.0
      %638 = vmatpush2.msra.mxu0 0.0
      %639 = vmatprep.subr.mxu0 0.0
      %640 = vmatpush2.msra.mxu0 0.0
      %641 = vmatprep.subr.mxu0 0.0
      %642 = vmatpush2.msra.mxu0 0.0
      %643 = vmatprep.subr.mxu0 0.0
      %644 = vmatpush2.msra.mxu0 0.0
      %645 = vmatprep.mubr.f32.mxu0 0.0
      %646 = vmatmul.mubr.f32.gmra.mxu0 %v572
      %v647 = vpop.f32.mrf.mxu0
      %v648 = vadd.f32 0.0, %v647
      %v649 = vpop.f32.mrf.mxu0
      %v650 = vadd.f32 0.0, %v649
      %651 = vdwg.mxu0
      %652 = vst [vmem:[%s143] sm:$0xff] %v648
      %653 = vst [vmem:[%s143 + $0x8] sm:$0xff] %v650
      %p654 = scmp.lt.s32.totalorder %s13, 1
      %s655 = scalar_select %p654, %s13, 1
      %s656 = smul.addr %s655, 2
      %s657 = smul.addr %s656, 8
      %s658 = scalar_lea.vmem %s2, %s657
      // Predicated region
      $region29: #{shared_atrous_conv2d.1} parent=27 // pred_check
        %p659 = pneg %p78
      $region30: #{shared_atrous_conv2d.1} parent=27 // pred_check_branch
        %661 = sbr.rel (%p659) target = $region32
      $region31: #{shared_atrous_conv2d.1} parent=27 // pred_region
        _
      $region32: #{shared_atrous_conv2d.1} parent=27 // pred_fallthru
        _
    $region28: #{shared_atrous_conv2d.1} parent=5 // pred_fallthru
      _
    %p662 = scmp.le.s32.totalorder 2, %s8
    // Predicated region
    $region33: #{shared_atrous_conv2d.1} parent=5 // pred_check
      %p663 = pneg %p662
    $region34: #{shared_atrous_conv2d.1} parent=5 // pred_check_branch
      %665 = sbr.rel (%p663) target = $region36
    $region35: #{shared_atrous_conv2d.1} parent=5 // pred_region
      %s666 = ssub.s32 %s8, 2
      // Predicated region
      $region37: #{shared_atrous_conv2d.1} parent=35 // pred_check
        %p667 = pneg %p84
      $region38: #{shared_atrous_conv2d.1} parent=35 // pred_check_branch
        %669 = sbr.rel (%p667) target = $region40
      $region39: #{shared_atrous_conv2d.1} parent=35 // pred_region
        %p670 = scmp.lt.s32.totalorder %s14, 1
        %s671 = scalar_select %p670, %s14, 1
        %s672 = smul.addr %s671, 2
        %s673 = smul.addr %s672, 8
        %s674 = scalar_lea.vmem %s2, %s673
      $region40: #{shared_atrous_conv2d.1} parent=35 // pred_fallthru
        _
    $region36: #{shared_atrous_conv2d.1} parent=5 // pred_fallthru
      _
  $region6: #{shared_atrous_conv2d.1} parent=0 // loop_footer
    %s12 = sadd.s32 1, %s8
  $region7: #{shared_atrous_conv2d.1} parent=0 // loop_footer_branch
    %7 = sbr.rel target = $region3
  $region8: #{shared_atrous_conv2d.1} parent=0 // loop_exit
    _

</llo_original>
